<compile_context>
chip_gen: v7x
topology: tpu7x:2x2x1
jax: 0.10.0
libtpu: 0.0.40
codegen_flags: <defaults>
</compile_context>

<pallas_src>
import jax
import jax.numpy as jnp
from jax.experimental import pallas as pl
from jax.experimental.pallas import tpu as pltpu


def _swish_kernel(x_ref, o_ref):
    x = x_ref[...]
    # Compute natively in f32 / bf16 (VPU & EUP are bf16-native on v6e/v7x;
    # on v5e Mosaic widens bf16 internally). Other dtypes go through f32.
    if x.dtype in (jnp.float32, jnp.bfloat16):
        xc = x
    else:
        xc = x.astype(jnp.float32)
    # sigmoid(x) == 0.5 * (tanh(x / 2) + 1): a single EUP op per element
    # (no vector divide / second transcendental).
    sig = 0.5 * (jnp.tanh(0.5 * xc) + 1.0)
    o_ref[...] = (xc * sig).astype(o_ref.dtype)


def _sublane(itemsize: int) -> int:
    """Sublane packing multiple: 8 rows for 4B, 16 for 2B, 32 for 1B dtypes."""
    return max(8, 8 * (4 // max(1, itemsize)))


def _default_tile_bytes() -> int:
    """~2 MiB/buffer on v5-class chips (16 MiB scoped VMEM), ~4 MiB elsewhere."""
    try:
        kind = jax.devices()[0].device_kind.lower()
    except Exception:  # pragma: no cover - defensive
        kind = ""
    if "v5" in kind:
        return 2 * 1024 * 1024
    return 4 * 1024 * 1024


def _choose_lanes(n: int, itemsize: int, max_lanes: int = 2048) -> int:
    """Largest multiple of 128 (<= max_lanes) dividing n, preferring a
    factorization with enough rows (>= 2 * sublane multiple) so the grid can
    have >= 2 aligned tiles. Returns 0 if no multiple of 128 divides n."""
    sub = _sublane(itemsize)
    best = 0
    lanes = max_lanes
    while lanes >= 128:
        if n % lanes == 0:
            if best == 0:
                best = lanes
            if (n // lanes) >= 2 * sub:
                return lanes
        lanes -= 128
    return best


def _swish_2d(x2d: jax.Array, *, target_tile_bytes: int | None = None) -> jax.Array:
    rows, lanes = x2d.shape
    itemsize = jnp.dtype(x2d.dtype).itemsize
    if target_tile_bytes is None:
        target_tile_bytes = _default_tile_bytes()
    sub = _sublane(itemsize)

    total_bytes = rows * lanes * itemsize
    tile_rows = max(1, target_tile_bytes // (lanes * itemsize))

    if total_bytes > target_tile_bytes:
        # Force >= 2 grid steps so the "parallel" axis can be sharded across
        # both TensorCores on v7x; keep dtype-aware sublane alignment.
        tile_rows = min(tile_rows, pl.cdiv(rows, 2))
        tile_rows = max(sub, (tile_rows // sub) * sub)
        tile_rows = min(tile_rows, rows)
    else:
        tile_rows = rows  # single full-extent block (small array)

    grid = (pl.cdiv(rows, tile_rows),)  # ragged last tile handled by Pallas
    n = rows * lanes
    cost = pl.CostEstimate(
        flops=3 * n,                # mul + tanh-scale work; advisory only
        transcendentals=n,          # one tanh per element
        bytes_accessed=2 * n * itemsize,
    )

    return pl.pallas_call(
        _swish_kernel,
        out_shape=jax.ShapeDtypeStruct((rows, lanes), x2d.dtype),
        grid_spec=pltpu.PrefetchScalarGridSpec(
            num_scalar_prefetch=0,
            grid=grid,
            in_specs=[pl.BlockSpec((tile_rows, lanes), lambda i: (i, 0))],
            out_specs=pl.BlockSpec((tile_rows, lanes), lambda i: (i, 0)),
        ),
        compiler_params=pltpu.CompilerParams(
            dimension_semantics=("parallel",),
        ),
        cost_estimate=cost,
    )(x2d)


def _swish_plain(x: jax.Array) -> jax.Array:
    """Plain-JAX swish (tail / tiny-array path), same compute-dtype policy."""
    cd = x.dtype if x.dtype in (jnp.float32, jnp.bfloat16) else jnp.float32
    xc = x.astype(cd)
    return (xc * jax.nn.sigmoid(xc)).astype(x.dtype)


def swish(x: jax.Array) -> jax.Array:
    """Elementwise Swish; matches PyTorch `x * sigmoid(x)` for any shape."""
    orig_shape = x.shape
    n = x.size
    if n == 0:
        return x

    itemsize = jnp.dtype(x.dtype).itemsize
    lanes = _choose_lanes(n, itemsize)
    if lanes:
        # Common case: no pad, no copy — view the data as a lane-dense
        # (rows, lanes) slab and reshape back afterwards.
        x2d = x.reshape(n // lanes, lanes)
        return _swish_2d(x2d).reshape(orig_shape)

    # Rare fallback: size not a multiple of 128. Run the bulk through the
    # kernel and only the (< lanes)-element tail in plain JAX — no whole-array
    # pad/slice copies.
    lanes = 512
    x_flat = jnp.ravel(x)
    bulk = (n // lanes) * lanes
    if bulk == 0:
        return _swish_plain(x)  # tiny array, single fused XLA pass
    head = _swish_2d(x_flat[:bulk].reshape(bulk // lanes, lanes)).reshape(bulk)
    tail = _swish_plain(x_flat[bulk:])
    return jnp.concatenate([head, tail]).reshape(orig_shape)


if __name__ == "__main__":
    key = jax.random.PRNGKey(0)
    # NCHW input, like a PyTorch conv activation map.
    x = jax.random.normal(key, (2, 4, 16, 16), dtype=jnp.float32)

    y = jax.block_until_ready(swish(x))

    # Reference check against plain-JAX swish (tanh-form sigmoid is exact in
    # exact arithmetic; tolerance covers EUP rounding differences).
    y_ref = x * jax.nn.sigmoid(x)
    assert y.shape == x.shape and y.dtype == x.dtype
    assert jnp.allclose(y, y_ref, atol=2e-6, rtol=2e-6)

    print("KERNEL_OK")
</pallas_src>

<mosaic_0001>
module attributes {stable_mosaic.version = 11 : i64} {
  func.func @_swish_kernel(%arg0: i32, %arg1: memref<16x128xf32, #tpu.memory_space<vmem>>, %arg2: memref<16x128xf32, #tpu.memory_space<vmem>>) attributes {dimension_semantics = [#tpu.dimension_semantics<parallel>], iteration_bounds = array<i64: 1>, scalar_prefetch = 0 : i64, scratch_operands = 0 : i64, tpu.core_type = #tpu.core_type<tc>, window_params = [{transform_indices = @transform_0, window_bounds = array<i64: 16, 128>}, {transform_indices = @transform_1, window_bounds = array<i64: 16, 128>}]} {
    %c0 = arith.constant 0 : index
    %c0_0 = arith.constant 0 : index
    %0 = vector.load %arg1[%c0, %c0_0] : memref<16x128xf32, #tpu.memory_space<vmem>>, vector<16x128xf32>
    %cst = arith.constant 5.000000e-01 : f32
    %1 = vector.broadcast %cst : f32 to vector<16x128xf32>
    %2 = arith.mulf %1, %0 : vector<16x128xf32>
    %3 = math.tanh %2 : vector<16x128xf32>
    %cst_1 = arith.constant 1.000000e+00 : f32
    %4 = vector.broadcast %cst_1 : f32 to vector<16x128xf32>
    %5 = arith.addf %3, %4 : vector<16x128xf32>
    %cst_2 = arith.constant 5.000000e-01 : f32
    %6 = vector.broadcast %cst_2 : f32 to vector<16x128xf32>
    %7 = arith.mulf %6, %5 : vector<16x128xf32>
    %8 = arith.mulf %0, %7 : vector<16x128xf32>
    %c0_3 = arith.constant 0 : index
    %c0_4 = arith.constant 0 : index
    %9 = vector.load %arg2[%c0_3, %c0_4] : memref<16x128xf32, #tpu.memory_space<vmem>>, vector<16x128xf32>
    tpu.vector_store %arg2[%c0_3, %c0_4], %8 {strides = array<i32>} : memref<16x128xf32, #tpu.memory_space<vmem>>, vector<16x128xf32>,
    return
  }
  func.func @transform_0(%arg0: i32) -> (i32, i32) {
    %c0_i32 = arith.constant 0 : i32
    %c0_i32_0 = arith.constant 0 : i32
    return %arg0, %c0_i32 : i32, i32
  }
  func.func @transform_1(%arg0: i32) -> (i32, i32) {
    %c0_i32 = arith.constant 0 : i32
    %c0_i32_0 = arith.constant 0 : i32
    return %arg0, %c0_i32 : i32, i32
  }
}

</mosaic_0001>

<llo_original>
// kernel: tpu_custom_call.1
$region0: #{tpu_custom_call.1}
  #allocation0 [shape = 'u32[]', space=smem, size = 0x4, offset = 0x4, fixed_abs, tag = 'smem constant byte address 0x4 - core index']
  #allocation1 [shape = 'u32[144,128]{1,0:T(1,128)}', space=vmem, size = 0x12000, scoped, tag = 'internal scratch']
  %s0 = inlined_call_operand.hbm [shape: f32[16,128], index: 0, kind: input, shape index: {}]
  %s1 = inlined_call_operand.hbm [shape: f32[16,128], index: 1, kind: output, shape index: {}]
  %s2 = sld [smem:[#allocation0]]
  $region18: #{tpu_custom_call.1} parent=0
    _
  %s4 = ssub.s32 1, %s2
  %s5 = scalar_select 0, %s4, %s2
  $region1: #{tpu_custom_call.1} parent=0
    #allocation2 [shape = 'u8[8192]{0}', space=vmem, size = 0x2000, scoped, tag = 'input window, operand 0, single buffered']
    #allocation3 [shape = 's32[1]{0}', space=sflag, size = 0x4, scoped, tag = 'scoped memory for tpu_custom_call.1']
    #allocation4 [shape = 's32[1]{0}', space=sflag, size = 0x4, scoped, tag = 'scoped memory for tpu_custom_call.1']
    #allocation5 [shape = 'u8[8192]{0}', space=vmem, size = 0x2000, scoped, tag = 'output window, operand 0, single buffered']
    %6 = vsyncpa [#allocation3], 0
    %7 = vsyncpa [#allocation4], 0
    // Predicated region
    $region2: #{tpu_custom_call.1} parent=1 // pred_check
      _
    $region3: #{tpu_custom_call.1} parent=1 // pred_check_branch
      %9 = sbr.rel (0) target = $region5
    $region4: #{tpu_custom_call.1} parent=1 // pred_region
      %s11 = ssub.s32 256, 256
      %12 = vsyncadd [#allocation3], %s11
      %s13 = sshll.u32 [#allocation2], 4
      %s14 = int_to_ptr.vmem [resolvable:$true] %s13
      %19 = dma.hbm_to_vmem [thread:$0]  %s0, 256, %s14, [#allocation3], 128, 128, 8
    $region5: #{tpu_custom_call.1} parent=1 // pred_fallthru
      _
    // Predicated region
    $region6: #{tpu_custom_call.1} parent=1 // pred_check
      _
    $region7: #{tpu_custom_call.1} parent=1 // pred_check_branch
      %21 = sbr.rel (0) target = $region9
    $region8: #{tpu_custom_call.1} parent=1 // pred_region
      %22 = dma.done [#allocation3], 256
    $region9: #{tpu_custom_call.1} parent=1 // pred_fallthru
      _
    %v23 = vld [vmem:[#allocation2] sm:$0xff]
    %v24 = vld [vmem:[#allocation2 + $0x8] sm:$0xff]
    %v25 = vmul.f32 %v23, 0.5
    %v26 = vmul.f32 %v24, 0.5
    %v27 = vtanh.pop %v25
    %v28 = vtanh.pop %v26
    %v29 = vadd.f32 %v27, 1.0
    %v30 = vadd.f32 %v28, 1.0
    %v31 = vmul.f32 %v29, 0.5
    %v32 = vmul.f32 %v30, 0.5
    %v33 = vmul.f32 %v23, %v31
    %v34 = vmul.f32 %v24, %v32
    %35 = vst [vmem:[#allocation5] sm:$0xff] %v33
    %36 = vst [vmem:[#allocation5 + $0x8] sm:$0xff] %v34
    // Predicated region
    $region10: #{tpu_custom_call.1} parent=1 // pred_check
      _
    $region11: #{tpu_custom_call.1} parent=1 // pred_check_branch
      %38 = sbr.rel (0) target = $region13
    $region12: #{tpu_custom_call.1} parent=1 // pred_region
      %s40 = ssub.s32 256, 256
      %41 = vsyncadd [#allocation4], %s40
      %s42 = sshll.u32 [#allocation5], 4
      %s43 = int_to_ptr.vmem [resolvable:$true] %s42
      %48 = dma.vmem_to_hbm [thread:$0]  %s43, 256, %s1, [#allocation4], 128, 128, 8
    $region13: #{tpu_custom_call.1} parent=1 // pred_fallthru
      _
    // Predicated region
    $region14: #{tpu_custom_call.1} parent=1 // pred_check
      _
    $region15: #{tpu_custom_call.1} parent=1 // pred_check_branch
      %50 = sbr.rel (0) target = $region17
    $region16: #{tpu_custom_call.1} parent=1 // pred_region
      %51 = dma.done [#allocation4], 256
    $region17: #{tpu_custom_call.1} parent=1 // pred_fallthru
      _
    %52 = vsyncpa [#allocation3], 1
    %53 = vsyncpa [#allocation4], 1

</llo_original>
